<compile_context>
chip_gen: v5e
topology: v5e:2x2
jax: 0.10.0
libtpu: 0.0.40
codegen_flags: <defaults>
</compile_context>

<pallas_src>
import jax
import jax.numpy as jnp
from jax import lax
from jax.experimental import pallas as pl
from jax.experimental.pallas import tpu as pltpu


def _vmem_capacity_bytes():
    """Per-core physical VMEM (128 MiB v5e/v6e, 64 MiB v7x); safe fallback."""
    try:
        cap = getattr(pltpu.get_tpu_info(), "vmem_capacity_bytes", None)
        if cap:
            return int(cap)
    except Exception:
        pass
    return 64 << 20   # v7x per-TC size == conservative lower bound


# ---------------------------------------------------------------------------
# Fused path: whole model resident in VMEM, single invocation.
# ---------------------------------------------------------------------------
def _generator_fused_kernel(x_ref, w1_ref, b1_ref, w2_ref, b2_ref, o_ref):
    n_layers = w1_ref.shape[0]
    h0 = x_ref[...].astype(jnp.float32)                      # (B, D) f32

    def layer(l, h):
        w1 = w1_ref[l]                                       # (D, D) bf16
        w2 = w2_ref[l]
        b1 = b1_ref[l].astype(jnp.float32)                   # (1, D)
        b2 = b2_ref[l].astype(jnp.float32)
        z = jnp.dot(h.astype(w1.dtype), w1,
                    preferred_element_type=jnp.float32)
        z = jnp.maximum(z + b1, 0.0)
        return jnp.dot(z.astype(w2.dtype), w2,
                       preferred_element_type=jnp.float32) + b2

    if n_layers <= 8:          # short: static unroll (LLO sees everything)
        h = h0
        for l in range(n_layers):
            h = layer(l, h)
    else:                      # long: bound vreg live ranges
        h = lax.fori_loop(0, n_layers, layer, h0)
    o_ref[...] = h.astype(o_ref.dtype)


# ---------------------------------------------------------------------------
# Streaming path: grid=(L,), per-layer weight blocks streamed from HBM,
# running activation kept in an f32 VMEM scratch, biases resident,
# output written once at the final layer.
# ---------------------------------------------------------------------------
def _generator_stream_kernel(x_ref, w1_ref, b1_ref, w2_ref, b2_ref, o_ref,
                             h_ref):
    layer = pl.program_id(0)
    n_layers = pl.num_programs(0)

    @pl.when(layer == 0)
    def _():
        h_ref[...] = x_ref[...].astype(jnp.float32)

    h = h_ref[...]                                           # (B, D) f32
    b1 = b1_ref[layer].astype(jnp.float32)                   # (1, D) resident
    b2 = b2_ref[layer].astype(jnp.float32)
    z = jnp.dot(h.astype(w1_ref.dtype), w1_ref[...],
                preferred_element_type=jnp.float32)
    z = jnp.maximum(z + b1, 0.0)
    h2 = jnp.dot(z.astype(w2_ref.dtype), w2_ref[...],
                 preferred_element_type=jnp.float32) + b2
    h_ref[...] = h2

    @pl.when(layer == n_layers - 1)
    def _():
        o_ref[...] = h2.astype(o_ref.dtype)


# ---------------------------------------------------------------------------
# Weight-tiled streaming path: grid=(L, D // tk).  w1 tiled over output cols,
# w2 over input rows; partial sums accumulate into an f32 scratch.
# ---------------------------------------------------------------------------
def _generator_ktile_kernel(x_ref, w1_ref, b1_ref, w2_ref, b2_ref, o_ref,
                            h_ref, acc_ref):
    l = pl.program_id(0)
    k = pl.program_id(1)
    n_l = pl.num_programs(0)
    n_k = pl.num_programs(1)

    @pl.when(jnp.logical_and(l == 0, k == 0))
    def _():
        h_ref[...] = x_ref[...].astype(jnp.float32)

    @pl.when(k == 0)
    def _():
        acc_ref[...] = jnp.zeros_like(acc_ref)

    h = h_ref[...]                                           # (B, D) f32
    z = jnp.dot(h.astype(w1_ref.dtype), w1_ref[...],         # (B, tk)
                preferred_element_type=jnp.float32)
    z = jnp.maximum(z + b1_ref[...].astype(jnp.float32), 0.0)
    acc_ref[...] += jnp.dot(z.astype(w2_ref.dtype), w2_ref[...],
                            preferred_element_type=jnp.float32)  # (B, D)

    last_k = k == n_k - 1

    @pl.when(last_k)
    def _():
        h_ref[...] = acc_ref[...] + b2_ref[...].astype(jnp.float32)

    @pl.when(jnp.logical_and(last_k, l == n_l - 1))
    def _():
        o_ref[...] = h_ref[...].astype(o_ref.dtype)


# ---------------------------------------------------------------------------
# Dispatcher
# ---------------------------------------------------------------------------
def generator_forward(x, w1, b1, w2, b2, *, force_mode=None, ktile_tk=None):
    """x: (B, D); w1,w2: (L, D, D) pre-transposed (in, out); b1,b2: (L, D).

    force_mode: None (auto) | "fused" | "stream" | "ktile".
    """
    B, D = x.shape
    L = w1.shape[0]
    w_item = jnp.dtype(w1.dtype).itemsize
    b_item = jnp.dtype(b1.dtype).itemsize
    x_item = jnp.dtype(x.dtype).itemsize

    # Biases reshaped to (L, 1, D) so a layer slice is a clean (1, D) slab.
    b1r = b1.reshape(L, 1, D)
    b2r = b2.reshape(L, 1, D)

    vmem_cap = _vmem_capacity_bytes()
    budget = (vmem_cap * 4) // 5                 # ~20% headroom for compiler

    act_bytes = 2 * B * D * x_item + B * D * 4   # resident x + out + h scratch

    fused_need = 2 * L * D * D * w_item + 2 * L * D * b_item + act_bytes
    # Fused path forfeits DMA/compute overlap -> reserve it for tiny models.
    fused_thresh = min(4 << 20, vmem_cap // 16)

    # Layer streaming: double-buffered (D, D) w1/w2 blocks, resident biases.
    stream_need = 2 * 2 * D * D * w_item + 2 * L * D * b_item + act_bytes

    def ktile_need(tk):
        return (2 * 2 * D * tk * w_item          # double-buffered w1/w2 tiles
                + 2 * 2 * (tk + D) * b_item      # double-buffered bias tiles
                + act_bytes + B * D * 4)         # + f32 partial-sum scratch

    if force_mode is None:
        if fused_need <= fused_thresh:
            mode = "fused"
        elif stream_need <= budget or D % 128 != 0:
            mode = "stream"
        else:
            mode = "ktile"
    else:
        mode = force_mode

    def _limit(need):
        return int(min(max(need + need // 4, 32 << 20), budget))

    if mode == "fused":
        return pl.pallas_call(
            _generator_fused_kernel,
            out_shape=jax.ShapeDtypeStruct((B, D), x.dtype),
            compiler_params=pltpu.CompilerParams(
                vmem_limit_bytes=_limit(fused_need)),
        )(x, w1, b1r, w2, b2r)

    if mode == "stream":
        return pl.pallas_call(
            _generator_stream_kernel,
            out_shape=jax.ShapeDtypeStruct((B, D), x.dtype),
            grid_spec=pltpu.PrefetchScalarGridSpec(
                num_scalar_prefetch=0,
                grid=(L,),
                in_specs=[
                    pl.BlockSpec((B, D), lambda l: (0, 0)),                    # x (resident)
                    pl.BlockSpec((pl.Squeezed(), D, D), lambda l: (l, 0, 0)),  # w1[l]
                    pl.BlockSpec((L, 1, D), lambda l: (0, 0, 0)),              # b1 (resident)
                    pl.BlockSpec((pl.Squeezed(), D, D), lambda l: (l, 0, 0)),  # w2[l]
                    pl.BlockSpec((L, 1, D), lambda l: (0, 0, 0)),              # b2 (resident)
                ],
                out_specs=pl.BlockSpec((B, D), lambda l: (0, 0)),
                scratch_shapes=[pltpu.VMEM((B, D), jnp.float32)],   # running act
            ),
            compiler_params=pltpu.CompilerParams(
                dimension_semantics=("arbitrary",),     # layers are sequential
                vmem_limit_bytes=_limit(stream_need),
            ),
        )(x, w1, b1r, w2, b2r)

    # ---- ktile: grid=(L, D // tk) weight-tiled streaming ----
    assert D % 128 == 0, "ktile path needs lane-aligned block_dims (D % 128 == 0)"
    if ktile_tk is not None:
        tk = ktile_tk
    else:
        tk = 128
        for cand in (1024, 512, 256, 128):
            if D % cand == 0 and ktile_need(cand) <= budget:
                tk = cand
                break
    assert D % tk == 0 and tk % 128 == 0
    n_k = D // tk

    return pl.pallas_call(
        _generator_ktile_kernel,
        out_shape=jax.ShapeDtypeStruct((B, D), x.dtype),
        grid_spec=pltpu.PrefetchScalarGridSpec(
            num_scalar_prefetch=0,
            grid=(L, n_k),
            in_specs=[
                pl.BlockSpec((B, D), lambda l, k: (0, 0)),                     # x (resident)
                pl.BlockSpec((pl.Squeezed(), D, tk), lambda l, k: (l, 0, k)),  # w1 col-tile
                pl.BlockSpec((pl.Squeezed(), 1, tk), lambda l, k: (l, 0, k)),  # b1 tile
                pl.BlockSpec((pl.Squeezed(), tk, D), lambda l, k: (l, k, 0)),  # w2 row-tile
                pl.BlockSpec((pl.Squeezed(), 1, D), lambda l, k: (l, 0, 0)),   # b2[l]
            ],
            out_specs=pl.BlockSpec((B, D), lambda l, k: (0, 0)),
            scratch_shapes=[pltpu.VMEM((B, D), jnp.float32),    # running act
                            pltpu.VMEM((B, D), jnp.float32)],   # partial sums
        ),
        compiler_params=pltpu.CompilerParams(
            dimension_semantics=("arbitrary", "arbitrary"),
            vmem_limit_bytes=_limit(ktile_need(tk)),
        ),
    )(x, w1, b1r, w2, b2r)


# ---------------------------------------------------------------------------
# Params + pure-JAX reference
# ---------------------------------------------------------------------------
def init_generator_params(key, n_layers, block_dims, dtype=jnp.bfloat16):
    """Synthetic init (PyTorch-Linear-style bounds); weights stored bf16,
    pre-transposed to (L, in, out)."""
    bound = float(block_dims) ** -0.5
    keys = jax.random.split(key, 4)
    w1 = jax.random.uniform(keys[0], (n_layers, block_dims, block_dims),
                            jnp.float32, -bound, bound).astype(dtype)
    b1 = jax.random.uniform(keys[1], (n_layers, block_dims),
                            jnp.float32, -bound, bound).astype(dtype)
    w2 = jax.random.uniform(keys[2], (n_layers, block_dims, block_dims),
                            jnp.float32, -bound, bound).astype(dtype)
    b2 = jax.random.uniform(keys[3], (n_layers, block_dims),
                            jnp.float32, -bound, bound).astype(dtype)
    return w1, b1, w2, b2


def generator_reference(x, w1, b1, w2, b2):
    """Pure-JAX reference with the same bf16-weight / f32-accumulate scheme."""
    h = x.astype(jnp.float32)
    for l in range(w1.shape[0]):
        z = jnp.dot(h.astype(w1.dtype), w1[l],
                    preferred_element_type=jnp.float32)
        z = jnp.maximum(z + b1[l].astype(jnp.float32), 0.0)
        h = jnp.dot(z.astype(w2.dtype), w2[l],
                    preferred_element_type=jnp.float32)
        h = h + b2[l].astype(jnp.float32)
    return h.astype(x.dtype)


if __name__ == "__main__":
    key = jax.random.PRNGKey(0)
    kx, kp, k2 = jax.random.split(key, 3)

    # --- Config 1: tiny model -> fused path (+ forced stream path check) ---
    n_layers, block_dims, batch = 3, 128, 8
    x = jax.random.normal(kx, (batch, block_dims), jnp.float32)
    w1, b1, w2, b2 = init_generator_params(kp, n_layers, block_dims)
    ref = generator_reference(x, w1, b1, w2, b2)

    out_fused = jax.block_until_ready(generator_forward(x, w1, b1, w2, b2))
    out_stream = jax.block_until_ready(
        generator_forward(x, w1, b1, w2, b2, force_mode="stream"))

    assert out_fused.shape == (batch, block_dims)
    assert out_stream.shape == (batch, block_dims)
    assert jnp.allclose(out_fused, ref, atol=1e-3, rtol=1e-3), "fused mismatch"
    assert jnp.allclose(out_stream, ref, atol=1e-3, rtol=1e-3), "stream mismatch"

    # --- Config 2: exercise the (L, D // tk) weight-tiled path (n_k = 2) ---
    n2, d2, bs2 = 2, 256, 8
    kx2, kp2 = jax.random.split(k2)
    x2 = jax.random.normal(kx2, (bs2, d2), jnp.float32)
    p2 = init_generator_params(kp2, n2, d2)
    ref2 = generator_reference(x2, *p2)
    out_ktile = jax.block_until_ready(
        generator_forward(x2, *p2, force_mode="ktile", ktile_tk=128))
    assert out_ktile.shape == (bs2, d2)
    assert jnp.allclose(out_ktile, ref2, atol=1e-3, rtol=1e-3), "ktile mismatch"

    print("KERNEL_OK")
</pallas_src>

<mosaic_0001>
module attributes {stable_mosaic.version = 11 : i64} {
  func.func @_generator_fused_kernel(%arg0: memref<8x128xf32, #tpu.memory_space<vmem>>, %arg1: memref<3x128x128xbf16, #tpu.memory_space<vmem>>, %arg2: memref<3x1x128xbf16, #tpu.memory_space<vmem>>, %arg3: memref<3x128x128xbf16, #tpu.memory_space<vmem>>, %arg4: memref<3x1x128xbf16, #tpu.memory_space<vmem>>, %arg5: memref<8x128xf32, #tpu.memory_space<vmem>>) attributes {dimension_semantics = [], scalar_prefetch = 0 : i64, scratch_operands = 0 : i64, tpu.core_type = #tpu.core_type<tc>} {
    %c0 = arith.constant 0 : index
    %c0_0 = arith.constant 0 : index
    %0 = vector.load %arg0[%c0, %c0_0] : memref<8x128xf32, #tpu.memory_space<vmem>>, vector<8x128xf32>
    %c0_1 = arith.constant 0 : index
    %c0_2 = arith.constant 0 : index
    %c0_3 = arith.constant 0 : index
    %1 = vector.load %arg1[%c0_1, %c0_2, %c0_3] : memref<3x128x128xbf16, #tpu.memory_space<vmem>>, vector<1x128x128xbf16>
    %2 = vector.shape_cast %1 : vector<1x128x128xbf16> to vector<128x128xbf16>
    %c0_4 = arith.constant 0 : index
    %c0_5 = arith.constant 0 : index
    %c0_6 = arith.constant 0 : index
    %3 = vector.load %arg3[%c0_4, %c0_5, %c0_6] : memref<3x128x128xbf16, #tpu.memory_space<vmem>>, vector<1x128x128xbf16>
    %4 = vector.shape_cast %3 : vector<1x128x128xbf16> to vector<128x128xbf16>
    %c0_7 = arith.constant 0 : index
    %c0_8 = arith.constant 0 : index
    %c0_9 = arith.constant 0 : index
    %5 = vector.load %arg2[%c0_7, %c0_8, %c0_9] : memref<3x1x128xbf16, #tpu.memory_space<vmem>>, vector<1x1x128xbf16>
    %6 = vector.shape_cast %5 : vector<1x1x128xbf16> to vector<1x128xbf16>
    %7 = arith.extf %6 : vector<1x128xbf16> to vector<1x128xf32>
    %c0_10 = arith.constant 0 : index
    %c0_11 = arith.constant 0 : index
    %c0_12 = arith.constant 0 : index
    %8 = vector.load %arg4[%c0_10, %c0_11, %c0_12] : memref<3x1x128xbf16, #tpu.memory_space<vmem>>, vector<1x1x128xbf16>
    %9 = vector.shape_cast %8 : vector<1x1x128xbf16> to vector<1x128xbf16>
    %10 = arith.extf %9 : vector<1x128xbf16> to vector<1x128xf32>
    %11 = arith.truncf %0 : vector<8x128xf32> to vector<8x128xbf16>
    %cst = arith.constant dense<0.000000e+00> : vector<8x128xf32>
    %12 = tpu.matmul %11, %2, %cst {dimension_numbers = #tpu.dot_dimension_numbers<[1], [0], [0], [1], [0, 0, 1, 1], [], []>} : vector<8x128xbf16>, vector<128x128xbf16>, vector<8x128xf32> -> vector<8x128xf32>
    %13 = vector.broadcast %7 : vector<1x128xf32> to vector<8x128xf32>
    %14 = arith.addf %12, %13 : vector<8x128xf32>
    %cst_13 = arith.constant 0.000000e+00 : f32
    %15 = vector.broadcast %cst_13 : f32 to vector<8x128xf32>
    %16 = arith.maximumf %14, %15 : vector<8x128xf32>
    %17 = arith.truncf %16 : vector<8x128xf32> to vector<8x128xbf16>
    %cst_14 = arith.constant dense<0.000000e+00> : vector<8x128xf32>
    %18 = tpu.matmul %17, %4, %cst_14 {dimension_numbers = #tpu.dot_dimension_numbers<[1], [0], [0], [1], [0, 0, 1, 1], [], []>} : vector<8x128xbf16>, vector<128x128xbf16>, vector<8x128xf32> -> vector<8x128xf32>
    %19 = vector.broadcast %10 : vector<1x128xf32> to vector<8x128xf32>
    %20 = arith.addf %18, %19 : vector<8x128xf32>
    %c1 = arith.constant 1 : index
    %c0_15 = arith.constant 0 : index
    %c0_16 = arith.constant 0 : index
    %21 = vector.load %arg1[%c1, %c0_15, %c0_16] : memref<3x128x128xbf16, #tpu.memory_space<vmem>>, vector<1x128x128xbf16>
    %22 = vector.shape_cast %21 : vector<1x128x128xbf16> to vector<128x128xbf16>
    %c1_17 = arith.constant 1 : index
    %c0_18 = arith.constant 0 : index
    %c0_19 = arith.constant 0 : index
    %23 = vector.load %arg3[%c1_17, %c0_18, %c0_19] : memref<3x128x128xbf16, #tpu.memory_space<vmem>>, vector<1x128x128xbf16>
    %24 = vector.shape_cast %23 : vector<1x128x128xbf16> to vector<128x128xbf16>
    %c1_20 = arith.constant 1 : index
    %c0_21 = arith.constant 0 : index
    %c0_22 = arith.constant 0 : index
    %25 = vector.load %arg2[%c1_20, %c0_21, %c0_22] : memref<3x1x128xbf16, #tpu.memory_space<vmem>>, vector<1x1x128xbf16>
    %26 = vector.shape_cast %25 : vector<1x1x128xbf16> to vector<1x128xbf16>
    %27 = arith.extf %26 : vector<1x128xbf16> to vector<1x128xf32>
    %c1_23 = arith.constant 1 : index
    %c0_24 = arith.constant 0 : index
    %c0_25 = arith.constant 0 : index
    %28 = vector.load %arg4[%c1_23, %c0_24, %c0_25] : memref<3x1x128xbf16, #tpu.memory_space<vmem>>, vector<1x1x128xbf16>
    %29 = vector.shape_cast %28 : vector<1x1x128xbf16> to vector<1x128xbf16>
    %30 = arith.extf %29 : vector<1x128xbf16> to vector<1x128xf32>
    %31 = arith.truncf %20 : vector<8x128xf32> to vector<8x128xbf16>
    %cst_26 = arith.constant dense<0.000000e+00> : vector<8x128xf32>
    %32 = tpu.matmul %31, %22, %cst_26 {dimension_numbers = #tpu.dot_dimension_numbers<[1], [0], [0], [1], [0, 0, 1, 1], [], []>} : vector<8x128xbf16>, vector<128x128xbf16>, vector<8x128xf32> -> vector<8x128xf32>
    %33 = vector.broadcast %27 : vector<1x128xf32> to vector<8x128xf32>
    %34 = arith.addf %32, %33 : vector<8x128xf32>
    %cst_27 = arith.constant 0.000000e+00 : f32
    %35 = vector.broadcast %cst_27 : f32 to vector<8x128xf32>
    %36 = arith.maximumf %34, %35 : vector<8x128xf32>
    %37 = arith.truncf %36 : vector<8x128xf32> to vector<8x128xbf16>
    %cst_28 = arith.constant dense<0.000000e+00> : vector<8x128xf32>
    %38 = tpu.matmul %37, %24, %cst_28 {dimension_numbers = #tpu.dot_dimension_numbers<[1], [0], [0], [1], [0, 0, 1, 1], [], []>} : vector<8x128xbf16>, vector<128x128xbf16>, vector<8x128xf32> -> vector<8x128xf32>
    %39 = vector.broadcast %30 : vector<1x128xf32> to vector<8x128xf32>
    %40 = arith.addf %38, %39 : vector<8x128xf32>
    %c2 = arith.constant 2 : index
    %c0_29 = arith.constant 0 : index
    %c0_30 = arith.constant 0 : index
    %41 = vector.load %arg1[%c2, %c0_29, %c0_30] : memref<3x128x128xbf16, #tpu.memory_space<vmem>>, vector<1x128x128xbf16>
    %42 = vector.shape_cast %41 : vector<1x128x128xbf16> to vector<128x128xbf16>
    %c2_31 = arith.constant 2 : index
    %c0_32 = arith.constant 0 : index
    %c0_33 = arith.constant 0 : index
    %43 = vector.load %arg3[%c2_31, %c0_32, %c0_33] : memref<3x128x128xbf16, #tpu.memory_space<vmem>>, vector<1x128x128xbf16>
    %44 = vector.shape_cast %43 : vector<1x128x128xbf16> to vector<128x128xbf16>
    %c2_34 = arith.constant 2 : index
    %c0_35 = arith.constant 0 : index
    %c0_36 = arith.constant 0 : index
    %45 = vector.load %arg2[%c2_34, %c0_35, %c0_36] : memref<3x1x128xbf16, #tpu.memory_space<vmem>>, vector<1x1x128xbf16>
    %46 = vector.shape_cast %45 : vector<1x1x128xbf16> to vector<1x128xbf16>
    %47 = arith.extf %46 : vector<1x128xbf16> to vector<1x128xf32>
    %c2_37 = arith.constant 2 : index
    %c0_38 = arith.constant 0 : index
    %c0_39 = arith.constant 0 : index
    %48 = vector.load %arg4[%c2_37, %c0_38, %c0_39] : memref<3x1x128xbf16, #tpu.memory_space<vmem>>, vector<1x1x128xbf16>
    %49 = vector.shape_cast %48 : vector<1x1x128xbf16> to vector<1x128xbf16>
    %50 = arith.extf %49 : vector<1x128xbf16> to vector<1x128xf32>
    %51 = arith.truncf %40 : vector<8x128xf32> to vector<8x128xbf16>
    %cst_40 = arith.constant dense<0.000000e+00> : vector<8x128xf32>
    %52 = tpu.matmul %51, %42, %cst_40 {dimension_numbers = #tpu.dot_dimension_numbers<[1], [0], [0], [1], [0, 0, 1, 1], [], []>} : vector<8x128xbf16>, vector<128x128xbf16>, vector<8x128xf32> -> vector<8x128xf32>
    %53 = vector.broadcast %47 : vector<1x128xf32> to vector<8x128xf32>
    %54 = arith.addf %52, %53 : vector<8x128xf32>
    %cst_41 = arith.constant 0.000000e+00 : f32
    %55 = vector.broadcast %cst_41 : f32 to vector<8x128xf32>
    %56 = arith.maximumf %54, %55 : vector<8x128xf32>
    %57 = arith.truncf %56 : vector<8x128xf32> to vector<8x128xbf16>
    %cst_42 = arith.constant dense<0.000000e+00> : vector<8x128xf32>
    %58 = tpu.matmul %57, %44, %cst_42 {dimension_numbers = #tpu.dot_dimension_numbers<[1], [0], [0], [1], [0, 0, 1, 1], [], []>} : vector<8x128xbf16>, vector<128x128xbf16>, vector<8x128xf32> -> vector<8x128xf32>
    %59 = vector.broadcast %50 : vector<1x128xf32> to vector<8x128xf32>
    %60 = arith.addf %58, %59 : vector<8x128xf32>
    %c0_43 = arith.constant 0 : index
    %c0_44 = arith.constant 0 : index
    %61 = vector.load %arg5[%c0_43, %c0_44] : memref<8x128xf32, #tpu.memory_space<vmem>>, vector<8x128xf32>
    tpu.vector_store %arg5[%c0_43, %c0_44], %60 {strides = array<i32>} : memref<8x128xf32, #tpu.memory_space<vmem>>, vector<8x128xf32>,
    return
  }
}

</mosaic_0001>

<llo_original>
// kernel: tpu_custom_call.1
$region0: #{tpu_custom_call.1}
  #allocation0 [shape = 'u32[]', space=smem, size = 0x4, offset = 0x4, fixed_abs, tag = 'smem constant byte address 0x4 - core index']
  #allocation1 [shape = 'u32[72,128]{1,0:T(1,128)}', space=vmem, size = 0x9000, scoped, tag = 'internal scratch']
  %s0 = inlined_call_operand.hbm [shape: f32[8,128], index: 0, kind: input, shape index: {}]
  %s1 = inlined_call_operand.hbm [shape: bf16[3,128,128], index: 1, kind: input, shape index: {}]
  %s2 = inlined_call_operand.vmem [shape: bf16[3,1,128], index: 2, kind: input, shape index: {}]
  %s3 = inlined_call_operand.hbm [shape: bf16[3,128,128], index: 3, kind: input, shape index: {}]
  %s4 = inlined_call_operand.vmem [shape: bf16[3,1,128], index: 4, kind: input, shape index: {}]
  %s5 = inlined_call_operand.hbm [shape: f32[8,128], index: 5, kind: output, shape index: {}]
  %s6 = sld [smem:[#allocation0]]
  $region42: #{tpu_custom_call.1} parent=0
    _
  %s8 = ssub.s32 1, %s6
  %s9 = scalar_select 0, %s8, %s6
  $region1: #{tpu_custom_call.1} parent=0
    #allocation2 [shape = 'u8[4096]{0}', space=vmem, size = 0x1000, scoped, tag = 'input window, operand 0, single buffered']
    #allocation3 [shape = 's32[1]{0}', space=sflag, size = 0x4, scoped, tag = 'scoped memory for tpu_custom_call.1']
    #allocation4 [shape = 's32[1]{0}', space=sflag, size = 0x4, scoped, tag = 'scoped memory for tpu_custom_call.1']
    #allocation5 [shape = 'u8[98304]{0}', space=vmem, size = 0x18000, scoped, tag = 'input window, operand 1, single buffered']
    #allocation6 [shape = 's32[1]{0}', space=sflag, size = 0x4, scoped, tag = 'scoped memory for tpu_custom_call.1']
    #allocation7 [shape = 'u8[98304]{0}', space=vmem, size = 0x18000, scoped, tag = 'input window, operand 3, single buffered']
    #allocation8 [shape = 'u8[4096]{0}', space=vmem, size = 0x1000, scoped, tag = 'output window, operand 0, single buffered']
    %10 = vsyncpa [#allocation3], 0
    %11 = vsyncpa [#allocation6], 0
    %12 = vsyncpa [#allocation4], 0
    // Predicated region
    $region2: #{tpu_custom_call.1} parent=1 // pred_check
      _
    $region3: #{tpu_custom_call.1} parent=1 // pred_check_branch
      %14 = sbr.rel (0) target = $region5
    $region4: #{tpu_custom_call.1} parent=1 // pred_region
      %16 = vsyncadd [#allocation3], 0
      %s18 = sshll.u32 %s0, 4
      %s19 = int_to_ptr.hbm [resolvable:$true] %s18
      %s20 = sshll.u32 [#allocation2], 4
      %s21 = int_to_ptr.vmem [resolvable:$true] %s20
      %23 = dma.hbm_to_vmem [thread:$0]  %s19, 128, %s21, [#allocation3]
    $region5: #{tpu_custom_call.1} parent=1 // pred_fallthru
      _
    // Predicated region
    $region6: #{tpu_custom_call.1} parent=1 // pred_check
      _
    $region7: #{tpu_custom_call.1} parent=1 // pred_check_branch
      %25 = sbr.rel (0) target = $region9
    $region8: #{tpu_custom_call.1} parent=1 // pred_region
      %27 = vsyncadd [#allocation6], 0
      %s28 = sshll.u32 %s1, 4
      %s29 = int_to_ptr.hbm [resolvable:$true] %s28
      %s30 = sshll.u32 [#allocation5], 4
      %s31 = int_to_ptr.vmem [resolvable:$true] %s30
      %36 = dma.hbm_to_vmem [thread:$0]  %s29, 3072, %s31, [#allocation6], 64, 64, 4
    $region9: #{tpu_custom_call.1} parent=1 // pred_fallthru
      _
    // Predicated region
    $region10: #{tpu_custom_call.1} parent=1 // pred_check
      _
    $region11: #{tpu_custom_call.1} parent=1 // pred_check_branch
      %38 = sbr.rel (0) target = $region13
    $region12: #{tpu_custom_call.1} parent=1 // pred_region
      _
    $region13: #{tpu_custom_call.1} parent=1 // pred_fallthru
      _
    // Predicated region
    $region14: #{tpu_custom_call.1} parent=1 // pred_check
      _
    $region15: #{tpu_custom_call.1} parent=1 // pred_check_branch
      %40 = sbr.rel (0) target = $region17
    $region16: #{tpu_custom_call.1} parent=1 // pred_region
      %42 = vsyncadd [#allocation6], 0
      %s43 = sshll.u32 %s3, 4
      %s44 = int_to_ptr.hbm [resolvable:$true] %s43
      %s45 = sshll.u32 [#allocation7], 4
      %s46 = int_to_ptr.vmem [resolvable:$true] %s45
      %51 = dma.hbm_to_vmem [thread:$0]  %s44, 3072, %s46, [#allocation6], 64, 64, 4
    $region17: #{tpu_custom_call.1} parent=1 // pred_fallthru
      _
    // Predicated region
    $region18: #{tpu_custom_call.1} parent=1 // pred_check
      _
    $region19: #{tpu_custom_call.1} parent=1 // pred_check_branch
      %53 = sbr.rel (0) target = $region21
    $region20: #{tpu_custom_call.1} parent=1 // pred_region
      _
    $region21: #{tpu_custom_call.1} parent=1 // pred_fallthru
      _
    // Predicated region
    $region22: #{tpu_custom_call.1} parent=1 // pred_check
      _
    $region23: #{tpu_custom_call.1} parent=1 // pred_check_branch
      %55 = sbr.rel (0) target = $region25
    $region24: #{tpu_custom_call.1} parent=1 // pred_region
      %57 = dma.done [#allocation3], 128
    $region25: #{tpu_custom_call.1} parent=1 // pred_fallthru
      _
    // Predicated region
    $region26: #{tpu_custom_call.1} parent=1 // pred_check
      _
    $region27: #{tpu_custom_call.1} parent=1 // pred_check_branch
      %59 = sbr.rel (0) target = $region29
    $region28: #{tpu_custom_call.1} parent=1 // pred_region
      %61 = dma.done [#allocation6], 3072
    $region29: #{tpu_custom_call.1} parent=1 // pred_fallthru
      _
    // Predicated region
    $region30: #{tpu_custom_call.1} parent=1 // pred_check
      _
    $region31: #{tpu_custom_call.1} parent=1 // pred_check_branch
      %63 = sbr.rel (0) target = $region33
    $region32: #{tpu_custom_call.1} parent=1 // pred_region
      %65 = dma.done [#allocation6], 3072
    $region33: #{tpu_custom_call.1} parent=1 // pred_fallthru
      _
    %v66 = vld [vmem:[#allocation2] sm:$0xff]
    %v67 = vld [vmem:[#allocation5] sm:$0xf]
    %v68 = vld [vmem:[#allocation5 + $0x4] sm:$0xf]
    %v69 = vld [vmem:[#allocation5 + $0x8] sm:$0xf]
    %v70 = vld [vmem:[#allocation5 + $0xc] sm:$0xf]
    %v71 = vld [vmem:[#allocation5 + $0x10] sm:$0xf]
    %v72 = vld [vmem:[#allocation5 + $0x14] sm:$0xf]
    %v73 = vld [vmem:[#allocation5 + $0x18] sm:$0xf]
    %v74 = vld [vmem:[#allocation5 + $0x1c] sm:$0xf]
    %v75 = vld [vmem:[#allocation5 + $0x20] sm:$0xf]
    %v76 = vld [vmem:[#allocation5 + $0x24] sm:$0xf]
    %v77 = vld [vmem:[#allocation5 + $0x28] sm:$0xf]
    %v78 = vld [vmem:[#allocation5 + $0x2c] sm:$0xf]
    %v79 = vld [vmem:[#allocation5 + $0x30] sm:$0xf]
    %v80 = vld [vmem:[#allocation5 + $0x34] sm:$0xf]
    %v81 = vld [vmem:[#allocation5 + $0x38] sm:$0xf]
    %v82 = vld [vmem:[#allocation5 + $0x3c] sm:$0xf]
    %v83 = vld [vmem:[#allocation7] sm:$0xf]
    %v84 = vld [vmem:[#allocation7 + $0x4] sm:$0xf]
    %v85 = vld [vmem:[#allocation7 + $0x8] sm:$0xf]
    %v86 = vld [vmem:[#allocation7 + $0xc] sm:$0xf]
    %v87 = vld [vmem:[#allocation7 + $0x10] sm:$0xf]
    %v88 = vld [vmem:[#allocation7 + $0x14] sm:$0xf]
    %v89 = vld [vmem:[#allocation7 + $0x18] sm:$0xf]
    %v90 = vld [vmem:[#allocation7 + $0x1c] sm:$0xf]
    %v91 = vld [vmem:[#allocation7 + $0x20] sm:$0xf]
    %v92 = vld [vmem:[#allocation7 + $0x24] sm:$0xf]
    %v93 = vld [vmem:[#allocation7 + $0x28] sm:$0xf]
    %v94 = vld [vmem:[#allocation7 + $0x2c] sm:$0xf]
    %v95 = vld [vmem:[#allocation7 + $0x30] sm:$0xf]
    %v96 = vld [vmem:[#allocation7 + $0x34] sm:$0xf]
    %v97 = vld [vmem:[#allocation7 + $0x38] sm:$0xf]
    %v98 = vld [vmem:[#allocation7 + $0x3c] sm:$0xf]
    %v99 = vld [vmem:[%s2] sm:$0x1]
    %v100 = vunpack.c.l.bf16 %v99
    %v101 = vld [vmem:[%s4] sm:$0x1]
    %v102 = vunpack.c.l.bf16 %v101
    %v103 = vpack.c.bf16 %v66, %v66
    %v104 = vperm.slane %v100, 0
    %v121 = vunpack.c.l.b16 %v67
    %v122 = vunpack.c.l.b16 %v68
    %v123 = vunpack.c.l.b16 %v69
    %v124 = vunpack.c.l.b16 %v70
    %v125 = vunpack.c.l.b16 %v71
    %v126 = vunpack.c.l.b16 %v72
    %v127 = vunpack.c.l.b16 %v73
    %v128 = vunpack.c.l.b16 %v74
    %v129 = vunpack.c.l.b16 %v75
    %v130 = vunpack.c.l.b16 %v76
    %v131 = vunpack.c.l.b16 %v77
    %v132 = vunpack.c.l.b16 %v78
    %v133 = vunpack.c.l.b16 %v79
    %v134 = vunpack.c.l.b16 %v80
    %v135 = vunpack.c.l.b16 %v81
    %v136 = vunpack.c.l.b16 %v82
    %v137 = vpack.c.b16 %v122, %v121
    %v138 = vpack.c.b16 %v124, %v123
    %v139 = vpack.c.b16 %v126, %v125
    %v140 = vpack.c.b16 %v128, %v127
    %v141 = vpack.c.b16 %v130, %v129
    %v142 = vpack.c.b16 %v132, %v131
    %v143 = vpack.c.b16 %v134, %v133
    %v144 = vpack.c.b16 %v136, %v135
    %153 = vmatpush.bf16.msra.mxu0 %v144
    %154 = vmatpush.bf16.msra.mxu0 %v143
    %155 = vmatpush.bf16.msra.mxu0 %v142
    %156 = vmatpush.bf16.msra.mxu0 %v141
    %157 = vmatpush.bf16.msra.mxu0 %v140
    %158 = vmatpush.bf16.msra.mxu0 %v139
    %159 = vmatpush.bf16.msra.mxu0 %v138
    %160 = vmatpush.bf16.msra.mxu0 %v137
    %161 = vmatmul.bf16.gmra.mxu0 %v103
    %v162 = vpop.f32.mrf.mxu0
    %v163 = vadd.f32 %v104, %v162
    %v164 = vpop.f32.mrf.mxu0
    %165 = vdwg.mxu0
    %v166 = vmax.f32 %v163, 0.0
    %v167 = vpack.c.bf16 %v166, %v166
    %v168 = vperm.slane %v102, 0
    %v185 = vunpack.c.l.b16 %v83
    %v186 = vunpack.c.l.b16 %v84
    %v187 = vunpack.c.l.b16 %v85
    %v188 = vunpack.c.l.b16 %v86
    %v189 = vunpack.c.l.b16 %v87
    %v190 = vunpack.c.l.b16 %v88
    %v191 = vunpack.c.l.b16 %v89
    %v192 = vunpack.c.l.b16 %v90
    %v193 = vunpack.c.l.b16 %v91
    %v194 = vunpack.c.l.b16 %v92
    %v195 = vunpack.c.l.b16 %v93
    %v196 = vunpack.c.l.b16 %v94
    %v197 = vunpack.c.l.b16 %v95
    %v198 = vunpack.c.l.b16 %v96
    %v199 = vunpack.c.l.b16 %v97
    %v200 = vunpack.c.l.b16 %v98
    %v201 = vpack.c.b16 %v186, %v185
    %v202 = vpack.c.b16 %v188, %v187
    %v203 = vpack.c.b16 %v190, %v189
    %v204 = vpack.c.b16 %v192, %v191
    %v205 = vpack.c.b16 %v194, %v193
    %v206 = vpack.c.b16 %v196, %v195
    %v207 = vpack.c.b16 %v198, %v197
    %v208 = vpack.c.b16 %v200, %v199
    %217 = vmatpush.bf16.msra.mxu0 %v208
    %218 = vmatpush.bf16.msra.mxu0 %v207
    %219 = vmatpush.bf16.msra.mxu0 %v206
    %220 = vmatpush.bf16.msra.mxu0 %v205
    %221 = vmatpush.bf16.msra.mxu0 %v204
    %222 = vmatpush.bf16.msra.mxu0 %v203
    %223 = vmatpush.bf16.msra.mxu0 %v202
    %224 = vmatpush.bf16.msra.mxu0 %v201
    %225 = vmatmul.bf16.gmra.mxu0 %v167
    %v226 = vpop.f32.mrf.mxu0
    %v227 = vadd.f32 %v168, %v226
    %v228 = vpop.f32.mrf.mxu0
    %229 = vdwg.mxu0
    %s230 = scalar_lea.vmem [#allocation5], 64
    %v231 = vld [vmem:[%s230] sm:$0xf]
    %v232 = vld [vmem:[%s230 + $0x4] sm:$0xf]
    %v233 = vld [vmem:[%s230 + $0x8] sm:$0xf]
    %v234 = vld [vmem:[%s230 + $0xc] sm:$0xf]
    %v235 = vld [vmem:[%s230 + $0x10] sm:$0xf]
    %v236 = vld [vmem:[%s230 + $0x14] sm:$0xf]
    %v237 = vld [vmem:[%s230 + $0x18] sm:$0xf]
    %v238 = vld [vmem:[%s230 + $0x1c] sm:$0xf]
    %v239 = vld [vmem:[%s230 + $0x20] sm:$0xf]
    %v240 = vld [vmem:[%s230 + $0x24] sm:$0xf]
    %v241 = vld [vmem:[%s230 + $0x28] sm:$0xf]
    %v242 = vld [vmem:[%s230 + $0x2c] sm:$0xf]
    %v243 = vld [vmem:[%s230 + $0x30] sm:$0xf]
    %v244 = vld [vmem:[%s230 + $0x34] sm:$0xf]
    %v245 = vld [vmem:[%s230 + $0x38] sm:$0xf]
    %v246 = vld [vmem:[%s230 + $0x3c] sm:$0xf]
    %s247 = scalar_lea.vmem [#allocation7], 64
    %v248 = vld [vmem:[%s247] sm:$0xf]
    %v249 = vld [vmem:[%s247 + $0x4] sm:$0xf]
    %v250 = vld [vmem:[%s247 + $0x8] sm:$0xf]
    %v251 = vld [vmem:[%s247 + $0xc] sm:$0xf]
    %v252 = vld [vmem:[%s247 + $0x10] sm:$0xf]
    %v253 = vld [vmem:[%s247 + $0x14] sm:$0xf]
    %v254 = vld [vmem:[%s247 + $0x18] sm:$0xf]
    %v255 = vld [vmem:[%s247 + $0x1c] sm:$0xf]
    %v256 = vld [vmem:[%s247 + $0x20] sm:$0xf]
    %v257 = vld [vmem:[%s247 + $0x24] sm:$0xf]
    %v258 = vld [vmem:[%s247 + $0x28] sm:$0xf]
    %v259 = vld [vmem:[%s247 + $0x2c] sm:$0xf]
    %v260 = vld [vmem:[%s247 + $0x30] sm:$0xf]
    %v261 = vld [vmem:[%s247 + $0x34] sm:$0xf]
    %v262 = vld [vmem:[%s247 + $0x38] sm:$0xf]
    %v263 = vld [vmem:[%s247 + $0x3c] sm:$0xf]
    %s264 = scalar_lea.vmem %s2, 1
    %v265 = vld [vmem:[%s264] sm:$0x1]
    %v266 = vunpack.c.l.bf16 %v265
    %s267 = scalar_lea.vmem %s4, 1
    %v268 = vld [vmem:[%s267] sm:$0x1]
    %v269 = vunpack.c.l.bf16 %v268
    %v270 = vpack.c.bf16 %v227, %v227
    %v271 = vperm.slane %v266, 0
    %v288 = vunpack.c.l.b16 %v231
    %v289 = vunpack.c.l.b16 %v232
    %v290 = vunpack.c.l.b16 %v233
    %v291 = vunpack.c.l.b16 %v234
    %v292 = vunpack.c.l.b16 %v235
    %v293 = vunpack.c.l.b16 %v236
    %v294 = vunpack.c.l.b16 %v237
    %v295 = vunpack.c.l.b16 %v238
    %v296 = vunpack.c.l.b16 %v239
    %v297 = vunpack.c.l.b16 %v240
    %v298 = vunpack.c.l.b16 %v241
    %v299 = vunpack.c.l.b16 %v242
    %v300 = vunpack.c.l.b16 %v243
    %v301 = vunpack.c.l.b16 %v244
    %v302 = vunpack.c.l.b16 %v245
    %v303 = vunpack.c.l.b16 %v246
    %v304 = vpack.c.b16 %v289, %v288
    %v305 = vpack.c.b16 %v291, %v290
    %v306 = vpack.c.b16 %v293, %v292
    %v307 = vpack.c.b16 %v295, %v294
    %v308 = vpack.c.b16 %v297, %v296
    %v309 = vpack.c.b16 %v299, %v298
    %v310 = vpack.c.b16 %v301, %v300
    %v311 = vpack.c.b16 %v303, %v302
    %320 = vmatpush.bf16.msra.mxu0 %v311
    %321 = vmatpush.bf16.msra.mxu0 %v310
    %322 = vmatpush.bf16.msra.mxu0 %v309
    %323 = vmatpush.bf16.msra.mxu0 %v308
    %324 = vmatpush.bf16.msra.mxu0 %v307
    %325 = vmatpush.bf16.msra.mxu0 %v306
    %326 = vmatpush.bf16.msra.mxu0 %v305
    %327 = vmatpush.bf16.msra.mxu0 %v304
    %328 = vmatmul.bf16.gmra.mxu0 %v270
    %v329 = vpop.f32.mrf.mxu0
    %v330 = vadd.f32 %v271, %v329
    %v331 = vpop.f32.mrf.mxu0
    %332 = vdwg.mxu0
    %v333 = vmax.f32 %v330, 0.0
    %v334 = vpack.c.bf16 %v333, %v333
    %v335 = vperm.slane %v269, 0
    %v352 = vunpack.c.l.b16 %v248
    %v353 = vunpack.c.l.b16 %v249
    %v354 = vunpack.c.l.b16 %v250
    %v355 = vunpack.c.l.b16 %v251
    %v356 = vunpack.c.l.b16 %v252
    %v357 = vunpack.c.l.b16 %v253
    %v358 = vunpack.c.l.b16 %v254
    %v359 = vunpack.c.l.b16 %v255
    %v360 = vunpack.c.l.b16 %v256
    %v361 = vunpack.c.l.b16 %v257
    %v362 = vunpack.c.l.b16 %v258
    %v363 = vunpack.c.l.b16 %v259
    %v364 = vunpack.c.l.b16 %v260
    %v365 = vunpack.c.l.b16 %v261
    %v366 = vunpack.c.l.b16 %v262
    %v367 = vunpack.c.l.b16 %v263
    %v368 = vpack.c.b16 %v353, %v352
    %v369 = vpack.c.b16 %v355, %v354
    %v370 = vpack.c.b16 %v357, %v356
    %v371 = vpack.c.b16 %v359, %v358
    %v372 = vpack.c.b16 %v361, %v360
    %v373 = vpack.c.b16 %v363, %v362
    %v374 = vpack.c.b16 %v365, %v364
    %v375 = vpack.c.b16 %v367, %v366
    %384 = vmatpush.bf16.msra.mxu0 %v375
    %385 = vmatpush.bf16.msra.mxu0 %v374
    %386 = vmatpush.bf16.msra.mxu0 %v373
    %387 = vmatpush.bf16.msra.mxu0 %v372
    %388 = vmatpush.bf16.msra.mxu0 %v371
    %389 = vmatpush.bf16.msra.mxu0 %v370
    %390 = vmatpush.bf16.msra.mxu0 %v369
    %391 = vmatpush.bf16.msra.mxu0 %v368
    %392 = vmatmul.bf16.gmra.mxu0 %v334
    %v393 = vpop.f32.mrf.mxu0
    %v394 = vadd.f32 %v335, %v393
    %v395 = vpop.f32.mrf.mxu0
    %396 = vdwg.mxu0
    %s397 = scalar_lea.vmem [#allocation5], 128
    %v398 = vld [vmem:[%s397] sm:$0xf]
    %v399 = vld [vmem:[%s397 + $0x4] sm:$0xf]
    %v400 = vld [vmem:[%s397 + $0x8] sm:$0xf]
    %v401 = vld [vmem:[%s397 + $0xc] sm:$0xf]
    %v402 = vld [vmem:[%s397 + $0x10] sm:$0xf]
    %v403 = vld [vmem:[%s397 + $0x14] sm:$0xf]
    %v404 = vld [vmem:[%s397 + $0x18] sm:$0xf]
    %v405 = vld [vmem:[%s397 + $0x1c] sm:$0xf]
    %v406 = vld [vmem:[%s397 + $0x20] sm:$0xf]
    %v407 = vld [vmem:[%s397 + $0x24] sm:$0xf]
    %v408 = vld [vmem:[%s397 + $0x28] sm:$0xf]
    %v409 = vld [vmem:[%s397 + $0x2c] sm:$0xf]
    %v410 = vld [vmem:[%s397 + $0x30] sm:$0xf]
    %v411 = vld [vmem:[%s397 + $0x34] sm:$0xf]
    %v412 = vld [vmem:[%s397 + $0x38] sm:$0xf]
    %v413 = vld [vmem:[%s397 + $0x3c] sm:$0xf]
    %s414 = scalar_lea.vmem [#allocation7], 128
    %v415 = vld [vmem:[%s414] sm:$0xf]
    %v416 = vld [vmem:[%s414 + $0x4] sm:$0xf]
    %v417 = vld [vmem:[%s414 + $0x8] sm:$0xf]
    %v418 = vld [vmem:[%s414 + $0xc] sm:$0xf]
    %v419 = vld [vmem:[%s414 + $0x10] sm:$0xf]
    %v420 = vld [vmem:[%s414 + $0x14] sm:$0xf]
    %v421 = vld [vmem:[%s414 + $0x18] sm:$0xf]
    %v422 = vld [vmem:[%s414 + $0x1c] sm:$0xf]
    %v423 = vld [vmem:[%s414 + $0x20] sm:$0xf]
    %v424 = vld [vmem:[%s414 + $0x24] sm:$0xf]
    %v425 = vld [vmem:[%s414 + $0x28] sm:$0xf]
    %v426 = vld [vmem:[%s414 + $0x2c] sm:$0xf]
    %v427 = vld [vmem:[%s414 + $0x30] sm:$0xf]
    %v428 = vld [vmem:[%s414 + $0x34] sm:$0xf]
    %v429 = vld [vmem:[%s414 + $0x38] sm:$0xf]
    %v430 = vld [vmem:[%s414 + $0x3c] sm:$0xf]
    %s431 = scalar_lea.vmem %s2, 2
    %v432 = vld [vmem:[%s431] sm:$0x1]
    %v433 = vunpack.c.l.bf16 %v432
    %s434 = scalar_lea.vmem %s4, 2
    %v435 = vld [vmem:[%s434] sm:$0x1]
    %v436 = vunpack.c.l.bf16 %v435
    %v437 = vpack.c.bf16 %v394, %v394
    %v438 = vperm.slane %v433, 0
    %v455 = vunpack.c.l.b16 %v398
    %v456 = vunpack.c.l.b16 %v399
    %v457 = vunpack.c.l.b16 %v400
    %v458 = vunpack.c.l.b16 %v401
    %v459 = vunpack.c.l.b16 %v402
    %v460 = vunpack.c.l.b16 %v403
    %v461 = vunpack.c.l.b16 %v404
    %v462 = vunpack.c.l.b16 %v405
    %v463 = vunpack.c.l.b16 %v406
    %v464 = vunpack.c.l.b16 %v407
    %v465 = vunpack.c.l.b16 %v408
    %v466 = vunpack.c.l.b16 %v409
    %v467 = vunpack.c.l.b16 %v410
    %v468 = vunpack.c.l.b16 %v411
    %v469 = vunpack.c.l.b16 %v412
    %v470 = vunpack.c.l.b16 %v413
    %v471 = vpack.c.b16 %v456, %v455
    %v472 = vpack.c.b16 %v458, %v457
    %v473 = vpack.c.b16 %v460, %v459
    %v474 = vpack.c.b16 %v462, %v461
    %v475 = vpack.c.b16 %v464, %v463
    %v476 = vpack.c.b16 %v466, %v465
    %v477 = vpack.c.b16 %v468, %v467
    %v478 = vpack.c.b16 %v470, %v469
    %487 = vmatpush.bf16.msra.mxu0 %v478
    %488 = vmatpush.bf16.msra.mxu0 %v477
    %489 = vmatpush.bf16.msra.mxu0 %v476
    %490 = vmatpush.bf16.msra.mxu0 %v475
    %491 = vmatpush.bf16.msra.mxu0 %v474
    %492 = vmatpush.bf16.msra.mxu0 %v473
    %493 = vmatpush.bf16.msra.mxu0 %v472
    %494 = vmatpush.bf16.msra.mxu0 %v471
    %495 = vmatmul.bf16.gmra.mxu0 %v437
    %v496 = vpop.f32.mrf.mxu0
    %v497 = vadd.f32 %v438, %v496
    %v498 = vpop.f32.mrf.mxu0
    %499 = vdwg.mxu0
    %v500 = vmax.f32 %v497, 0.0
    %v501 = vpack.c.bf16 %v500, %v500
    %v502 = vperm.slane %v436, 0
    %v519 = vunpack.c.l.b16 %v415
    %v520 = vunpack.c.l.b16 %v416
    %v521 = vunpack.c.l.b16 %v417
    %v522 = vunpack.c.l.b16 %v418
    %v523 = vunpack.c.l.b16 %v419
    %v524 = vunpack.c.l.b16 %v420
    %v525 = vunpack.c.l.b16 %v421
    %v526 = vunpack.c.l.b16 %v422
    %v527 = vunpack.c.l.b16 %v423
    %v528 = vunpack.c.l.b16 %v424
    %v529 = vunpack.c.l.b16 %v425
    %v530 = vunpack.c.l.b16 %v426
    %v531 = vunpack.c.l.b16 %v427
    %v532 = vunpack.c.l.b16 %v428
    %v533 = vunpack.c.l.b16 %v429
    %v534 = vunpack.c.l.b16 %v430
    %v535 = vpack.c.b16 %v520, %v519
    %v536 = vpack.c.b16 %v522, %v521
    %v537 = vpack.c.b16 %v524, %v523
    %v538 = vpack.c.b16 %v526, %v525
    %v539 = vpack.c.b16 %v528, %v527
    %v540 = vpack.c.b16 %v530, %v529
    %v541 = vpack.c.b16 %v532, %v531
    %v542 = vpack.c.b16 %v534, %v533
    %551 = vmatpush.bf16.msra.mxu0 %v542
    %552 = vmatpush.bf16.msra.mxu0 %v541
    %553 = vmatpush.bf16.msra.mxu0 %v540
    %554 = vmatpush.bf16.msra.mxu0 %v539
    %555 = vmatpush.bf16.msra.mxu0 %v538
    %556 = vmatpush.bf16.msra.mxu0 %v537
    %557 = vmatpush.bf16.msra.mxu0 %v536
    %558 = vmatpush.bf16.msra.mxu0 %v535
    %559 = vmatmul.bf16.gmra.mxu0 %v501
    %v560 = vpop.f32.mrf.mxu0
    %v561 = vadd.f32 %v502, %v560
    %v562 = vpop.f32.mrf.mxu0
    %563 = vdwg.mxu0
    %564 = vst [vmem:[#allocation8] sm:$0xff] %v561
    // Predicated region
    $region34: #{tpu_custom_call.1} parent=1 // pred_check
      _
    $region35: #{tpu_custom_call.1} parent=1 // pred_check_branch
      %566 = sbr.rel (0) target = $region37
    $region36: #{tpu_custom_call.1} parent=1 // pred_region
      %568 = vsyncadd [#allocation4], 0
      %s570 = sshll.u32 [#allocation8], 4
      %s571 = int_to_ptr.vmem [resolvable:$true] %s570
      %s572 = sshll.u32 %s5, 4
      %s573 = int_to_ptr.hbm [resolvable:$true] %s572
      %575 = dma.vmem_to_hbm [thread:$0]  %s571, 128, %s573, [#allocation4]
    $region37: #{tpu_custom_call.1} parent=1 // pred_fallthru
      _
    // Predicated region
    $region38: #{tpu_custom_call.1} parent=1 // pred_check
      _
    $region39: #{tpu_custom_call.1} parent=1 // pred_check_branch
      %577 = sbr.rel (0) target = $region41
    $region40: #{tpu_custom_call.1} parent=1 // pred_region
      %579 = dma.done [#allocation4], 128
    $region41: #{tpu_custom_call.1} parent=1 // pred_fallthru
      _
    %580 = vsyncpa [#allocation3], 1
    %581 = vsyncpa [#allocation6], 1
    %582 = vsyncpa [#allocation4], 1

</llo_original>
